<compile_context>
chip_gen: v7x
topology: tpu7x:2x2x1
jax: 0.10.0
libtpu: 0.0.40
codegen_flags: <defaults>
</compile_context>

<pallas_src>
from functools import partial

import jax
import jax.numpy as jnp
from jax import lax
from jax.experimental import pallas as pl
from jax.experimental.pallas import tpu as pltpu

POSE_PAD = 128   # fused fc_vect/fc_quat weight width (lane-dense MXU matmul)
POSE_OUT = 8     # narrow HBM writeback: 3 trans + 4 quat + 1 zero lane


def _round_up(n, m):
    return ((n + m - 1) // m) * m


def _posenet_head_kernel(x_ref, wf_ref, bf_ref, wp_ref, bp_ref, out_ref):
    # --- fc_feat + ReLU (dropout p=0.0 / eval mode -> identity) ---
    # bf16 cast done in-kernel (x arrives in HBM-native f32, read exactly once).
    x = x_ref[...].astype(jnp.bfloat16)                       # (TILE_B, F_in)
    h = jnp.dot(x, wf_ref[...],
                preferred_element_type=jnp.float32) + bf_ref[...]
    h = jnp.maximum(h, 0.0)

    # --- fc_vect / fc_quat fused into one lane-dense (NF, 128) matmul.
    # target_std / target_mean are pre-folded into wp / bp (fix_poses affine).
    p = jnp.dot(h.astype(jnp.bfloat16), wp_ref[...],
                preferred_element_type=jnp.float32) + bp_ref[...]

    # Keep only the 8 useful lanes for the writeback (lanes 8..127 are zero pad).
    p8 = p[:, :POSE_OUT]                                      # (TILE_B, 8) f32

    # L2-normalize quaternion lanes 3..6, matching F.normalize(p=2, dim=1, eps=1e-12).
    # rsqrt of the clamped sum-of-squares -> EUP slot, no VALU divide.
    lane = lax.broadcasted_iota(jnp.int32, p8.shape, 1)
    qmask = (lane >= 3) & (lane < 7)
    qsq = jnp.where(qmask, p8 * p8, 0.0)
    qsumsq = jnp.sum(qsq, axis=1, keepdims=True)
    inv_norm = lax.rsqrt(jnp.maximum(qsumsq, 1e-24))          # == 1 / max(||q||, 1e-12)
    out_ref[...] = jnp.where(qmask, p8 * inv_norm, p8)


def make_posenet_params(key, in_features, num_features,
                        target_mean=None, target_std=None):
    """Deterministic init matching PoseNet.__init__ (normal(0, std), zero bias).

    fc_vect/fc_quat are fused into one lane-padded weight, and the fix_poses
    affine (p * target_std + target_mean) is folded into wp/bp at init time.
    """
    kf, kv, kq = jax.random.split(key, 3)
    wf = 0.01 * jax.random.normal(kf, (in_features, num_features), jnp.float32)   # fc_feat
    bf = jnp.zeros((1, num_features), jnp.float32)
    wv = 0.5 * jax.random.normal(kv, (num_features, 3), jnp.float32)              # fc_vect
    wq = 0.01 * jax.random.normal(kq, (num_features, 4), jnp.float32)             # fc_quat

    if target_mean is None:
        target_mean = jnp.zeros((7,), jnp.float32)   # buffer default in PoseNet
    if target_std is None:
        target_std = jnp.ones((7,), jnp.float32)

    std_pad = jnp.zeros((POSE_PAD,), jnp.float32).at[:7].set(target_std)
    mean_pad = jnp.zeros((POSE_PAD,), jnp.float32).at[:7].set(target_mean)

    wp = (jnp.zeros((num_features, POSE_PAD), jnp.float32)
          .at[:, 0:3].set(wv).at[:, 3:7].set(wq))
    wp = wp * std_pad[None, :]                       # fold target_std into weight
    bp = mean_pad[None, :]                           # original bias is zero -> bp' = mean

    # bf16 weights feed the MXU natively; biases stay f32 (epilogue precision).
    return dict(wf=wf.astype(jnp.bfloat16), bf=bf,
                wp=wp.astype(jnp.bfloat16), bp=bp)


@partial(jax.jit, static_argnames=("tile_b",))
def posenet_forward(x_features, params, tile_b=512):
    """x_features: (B, in_features) backbone output -> poses (B, 7)."""
    B, F_in = x_features.shape
    NF = params["wf"].shape[1]

    # Clamp tile for small batches; keep it a multiple of 16 (bf16 x packs two
    # rows per sublane).  If that collapses to a single tile but B is large
    # enough, split into 2 tiles so both v7x TensorCores get work.
    tile_b = max(16, _round_up(min(tile_b, _round_up(B, 16)), 16))
    num_tiles = pl.cdiv(B, tile_b)
    if num_tiles == 1 and B > 16:
        tile_b = _round_up(-(-B // 2), 16)
        num_tiles = pl.cdiv(B, tile_b)

    # Grid-invariant operands are fetched once and kept resident; single-buffer
    # them so they don't burn a second (useless) VMEM copy.
    resident = dict(pipeline_mode=pl.Buffered(buffer_count=1))
    in_specs = [
        pl.BlockSpec((tile_b, F_in), lambda i: (i, 0)),               # x (f32, cast in-kernel)
        pl.BlockSpec((F_in, NF), lambda i: (0, 0), **resident),       # wf (resident)
        pl.BlockSpec((1, NF), lambda i: (0, 0), **resident),          # bf
        pl.BlockSpec((NF, POSE_PAD), lambda i: (0, 0), **resident),   # wp (resident)
        pl.BlockSpec((1, POSE_PAD), lambda i: (0, 0), **resident),    # bp
    ]
    out_specs = pl.BlockSpec((tile_b, POSE_OUT), lambda i: (i, 0))

    flops = 2 * B * F_in * NF + 2 * B * NF * POSE_PAD
    bytes_accessed = (B * F_in * 4            # x f32 read
                      + F_in * NF * 2         # wf bf16
                      + NF * POSE_PAD * 2     # wp bf16
                      + NF * 4 + POSE_PAD * 4  # biases f32
                      + B * POSE_OUT * 4)     # narrow output writeback

    out = pl.pallas_call(
        _posenet_head_kernel,
        out_shape=jax.ShapeDtypeStruct((B, POSE_OUT), jnp.float32),
        grid=(num_tiles,),
        in_specs=in_specs,
        out_specs=out_specs,
        compiler_params=pltpu.CompilerParams(
            dimension_semantics=("parallel",),        # megacore split on v7x
            # Re-derive for big tiles/feature widths on v5e/v6e (128 MiB phys);
            # keep at 32 MiB on v7x (64 MiB physical, needs headroom).
            vmem_limit_bytes=32 * 1024 * 1024,
        ),
        cost_estimate=pl.CostEstimate(
            flops=int(flops),
            transcendentals=int(B),
            bytes_accessed=int(bytes_accessed),
        ),
    )(x_features, params["wf"], params["bf"], params["wp"], params["bp"])
    return out[:, :7]


def posenet_forward_ref(x_features, params):
    """Pure-JAX reference reproducing the PyTorch forward (eval mode), same
    numerics as the kernel (bf16 MXU inputs, f32 accumulation + epilogue)."""
    x = x_features.astype(jnp.bfloat16)
    h = jnp.dot(x, params["wf"], preferred_element_type=jnp.float32) + params["bf"]
    h = jnp.maximum(h, 0.0)
    p = jnp.dot(h.astype(jnp.bfloat16), params["wp"],
                preferred_element_type=jnp.float32) + params["bp"]
    t = p[:, :3]
    q = p[:, 3:7]
    qn = jnp.maximum(jnp.sqrt(jnp.sum(q * q, axis=1, keepdims=True)), 1e-12)
    return jnp.concatenate([t, q / qn], axis=1)


if __name__ == "__main__":
    B, IN_FEATURES, NUM_FEATURES = 16, 512, 256   # small test shapes
    TILE_B = 512                                  # default; wrapper clamps to 16 for B=16

    key = jax.random.PRNGKey(0)
    kparam, kx = jax.random.split(key)
    params = make_posenet_params(kparam, IN_FEATURES, NUM_FEATURES)
    # stand-in for the torchvision backbone's output features (see TODO above)
    x_features = jax.random.normal(kx, (B, IN_FEATURES), jnp.float32)

    poses = posenet_forward(x_features, params, tile_b=TILE_B)
    poses = jax.block_until_ready(poses)

    ref = posenet_forward_ref(x_features, params)
    assert poses.shape == (B, 7)
    assert jnp.allclose(poses, ref, atol=1e-3, rtol=1e-3), "kernel mismatch vs reference"
    # quaternion part must be unit-norm (normalization done in f32)
    assert jnp.allclose(jnp.linalg.norm(poses[:, 3:], axis=1), 1.0, atol=1e-4)

    print("KERNEL_OK")
</pallas_src>

<mosaic_0001>
module attributes {stable_mosaic.version = 11 : i64} {
  func.func @_posenet_head_kernel(%arg0: i32, %arg1: memref<16x512xf32, #tpu.memory_space<vmem>>, %arg2: memref<512x256xbf16, #tpu.memory_space<vmem>>, %arg3: memref<1x256xf32, #tpu.memory_space<vmem>>, %arg4: memref<256x128xbf16, #tpu.memory_space<vmem>>, %arg5: memref<1x128xf32, #tpu.memory_space<vmem>>, %arg6: memref<16x8xf32, #tpu.memory_space<vmem>>) attributes {dimension_semantics = [#tpu.dimension_semantics<parallel>], iteration_bounds = array<i64: 1>, scalar_prefetch = 0 : i64, scratch_operands = 0 : i64, tpu.core_type = #tpu.core_type<tc>, window_params = [{transform_indices = @transform_0, window_bounds = array<i64: 16, 512>}, {pipeline_mode = #tpu.pipeline_mode<synchronous>, transform_indices = @transform_1, window_bounds = array<i64: 512, 256>}, {pipeline_mode = #tpu.pipeline_mode<synchronous>, transform_indices = @transform_2, window_bounds = array<i64: 1, 256>}, {pipeline_mode = #tpu.pipeline_mode<synchronous>, transform_indices = @transform_3, window_bounds = array<i64: 256, 128>}, {pipeline_mode = #tpu.pipeline_mode<synchronous>, transform_indices = @transform_4, window_bounds = array<i64: 1, 128>}, {transform_indices = @transform_5, window_bounds = array<i64: 16, 8>}]} {
    %c0 = arith.constant 0 : index
    %c0_0 = arith.constant 0 : index
    %0 = vector.load %arg1[%c0, %c0_0] : memref<16x512xf32, #tpu.memory_space<vmem>>, vector<16x512xf32>
    %1 = arith.truncf %0 : vector<16x512xf32> to vector<16x512xbf16>
    %c0_1 = arith.constant 0 : index
    %c0_2 = arith.constant 0 : index
    %2 = vector.load %arg2[%c0_1, %c0_2] : memref<512x256xbf16, #tpu.memory_space<vmem>>, vector<512x256xbf16>
    %cst = arith.constant dense<0.000000e+00> : vector<16x256xf32>
    %3 = tpu.matmul %1, %2, %cst {dimension_numbers = #tpu.dot_dimension_numbers<[1], [0], [0], [1], [0, 0, 1, 1], [], []>} : vector<16x512xbf16>, vector<512x256xbf16>, vector<16x256xf32> -> vector<16x256xf32>
    %c0_3 = arith.constant 0 : index
    %c0_4 = arith.constant 0 : index
    %4 = vector.load %arg3[%c0_3, %c0_4] : memref<1x256xf32, #tpu.memory_space<vmem>>, vector<1x256xf32>
    %5 = vector.broadcast %4 : vector<1x256xf32> to vector<16x256xf32>
    %6 = arith.addf %3, %5 : vector<16x256xf32>
    %cst_5 = arith.constant 0.000000e+00 : f32
    %7 = vector.broadcast %cst_5 : f32 to vector<16x256xf32>
    %8 = arith.maximumf %6, %7 : vector<16x256xf32>
    %9 = arith.truncf %8 : vector<16x256xf32> to vector<16x256xbf16>
    %c0_6 = arith.constant 0 : index
    %c0_7 = arith.constant 0 : index
    %10 = vector.load %arg4[%c0_6, %c0_7] : memref<256x128xbf16, #tpu.memory_space<vmem>>, vector<256x128xbf16>
    %cst_8 = arith.constant dense<0.000000e+00> : vector<16x128xf32>
    %11 = tpu.matmul %9, %10, %cst_8 {dimension_numbers = #tpu.dot_dimension_numbers<[1], [0], [0], [1], [0, 0, 1, 1], [], []>} : vector<16x256xbf16>, vector<256x128xbf16>, vector<16x128xf32> -> vector<16x128xf32>
    %c0_9 = arith.constant 0 : index
    %c0_10 = arith.constant 0 : index
    %12 = vector.load %arg5[%c0_9, %c0_10] : memref<1x128xf32, #tpu.memory_space<vmem>>, vector<1x128xf32>
    %13 = vector.broadcast %12 : vector<1x128xf32> to vector<16x128xf32>
    %14 = arith.addf %11, %13 : vector<16x128xf32>
    %15 = vector.extract_strided_slice %14 {offsets = [0, 0], sizes = [16, 8], strides = [1, 1]} : vector<16x128xf32> to vector<16x8xf32>
    %16 = tpu.iota {dimensions = array<i32: 1>} : vector<16x8xi32>
    %c3_i32 = arith.constant 3 : i32
    %17 = vector.broadcast %c3_i32 : i32 to vector<16x8xi32>
    %18 = arith.cmpi sge, %16, %17 : vector<16x8xi32>
    %c7_i32 = arith.constant 7 : i32
    %19 = vector.broadcast %c7_i32 : i32 to vector<16x8xi32>
    %20 = arith.cmpi slt, %16, %19 : vector<16x8xi32>
    %21 = arith.andi %18, %20 : vector<16x8xi1>
    %22 = arith.mulf %15, %15 : vector<16x8xf32>
    %cst_11 = arith.constant 0.000000e+00 : f32
    %23 = vector.broadcast %cst_11 : f32 to vector<16x8xf32>
    %24 = arith.select %21, %22, %23 : vector<16x8xi1>, vector<16x8xf32>
    %cst_12 = arith.constant dense<0.000000e+00> : vector<16xf32>
    %25 = vector.multi_reduction <add>, %24, %cst_12 [1] : vector<16x8xf32> to vector<16xf32>
    %26 = vector.shape_cast %25 : vector<16xf32> to vector<16x1xf32>
    %cst_13 = arith.constant 1.000000e-24 : f32
    %27 = vector.broadcast %cst_13 : f32 to vector<16x1xf32>
    %28 = arith.maximumf %26, %27 : vector<16x1xf32>
    %29 = math.rsqrt %28 : vector<16x1xf32>
    %30 = vector.broadcast %29 : vector<16x1xf32> to vector<16x8xf32>
    %31 = arith.mulf %15, %30 : vector<16x8xf32>
    %32 = arith.select %21, %31, %15 : vector<16x8xi1>, vector<16x8xf32>
    %c0_14 = arith.constant 0 : index
    %c0_15 = arith.constant 0 : index
    %33 = vector.load %arg6[%c0_14, %c0_15] : memref<16x8xf32, #tpu.memory_space<vmem>>, vector<16x8xf32>
    tpu.vector_store %arg6[%c0_14, %c0_15], %32 {strides = array<i32>} : memref<16x8xf32, #tpu.memory_space<vmem>>, vector<16x8xf32>,
    return
  }
  func.func @transform_0(%arg0: i32) -> (i32, i32) {
    %c0_i32 = arith.constant 0 : i32
    %c0_i32_0 = arith.constant 0 : i32
    return %arg0, %c0_i32 : i32, i32
  }
  func.func @transform_1(%arg0: i32) -> (i32, i32) {
    %c0_i32 = arith.constant 0 : i32
    %c0_i32_0 = arith.constant 0 : i32
    %c0_i32_1 = arith.constant 0 : i32
    return %c0_i32, %c0_i32_0 : i32, i32
  }
  func.func @transform_2(%arg0: i32) -> (i32, i32) {
    %c0_i32 = arith.constant 0 : i32
    %c0_i32_0 = arith.constant 0 : i32
    %c0_i32_1 = arith.constant 0 : i32
    return %c0_i32, %c0_i32_0 : i32, i32
  }
  func.func @transform_3(%arg0: i32) -> (i32, i32) {
    %c0_i32 = arith.constant 0 : i32
    %c0_i32_0 = arith.constant 0 : i32
    %c0_i32_1 = arith.constant 0 : i32
    return %c0_i32, %c0_i32_0 : i32, i32
  }
  func.func @transform_4(%arg0: i32) -> (i32, i32) {
    %c0_i32 = arith.constant 0 : i32
    %c0_i32_0 = arith.constant 0 : i32
    %c0_i32_1 = arith.constant 0 : i32
    return %c0_i32, %c0_i32_0 : i32, i32
  }
  func.func @transform_5(%arg0: i32) -> (i32, i32) {
    %c0_i32 = arith.constant 0 : i32
    %c0_i32_0 = arith.constant 0 : i32
    return %arg0, %c0_i32 : i32, i32
  }
}

</mosaic_0001>

<llo_original>
// kernel: posenet_forward.1
$region0: #{posenet_forward.1}
  #allocation0 [shape = 'u32[]', space=smem, size = 0x4, offset = 0x4, fixed_abs, tag = 'smem constant byte address 0x4 - core index']
  #allocation1 [shape = 'u32[144,128]{1,0:T(1,128)}', space=vmem, size = 0x12000, scoped, tag = 'internal scratch']
  %s0 = inlined_call_operand.hbm [shape: f32[16,512], index: 0, kind: input, shape index: {}]
  %s1 = inlined_call_operand.hbm [shape: bf16[512,256], index: 1, kind: input, shape index: {}]
  %s2 = inlined_call_operand.vmem [shape: f32[1,256], index: 2, kind: input, shape index: {}]
  %s3 = inlined_call_operand.hbm [shape: bf16[256,128], index: 3, kind: input, shape index: {}]
  %s4 = inlined_call_operand.vmem [shape: f32[1,128], index: 4, kind: input, shape index: {}]
  %s5 = inlined_call_operand.vmem [shape: f32[16,8], index: 5, kind: output, shape index: {}]
  %s6 = sld [smem:[#allocation0]]
  $region42: #{posenet_forward.1} parent=0
    _
  %s8 = ssub.s32 1, %s6
  %s9 = scalar_select 0, %s8, %s6
  $region1: #{posenet_forward.1} parent=0
    #allocation2 [shape = 'u8[32768]{0}', space=vmem, size = 0x8000, scoped, tag = 'input window, operand 0, single buffered']
    #allocation3 [shape = 's32[1]{0}', space=sflag, size = 0x4, scoped, tag = 'scoped memory for posenet_forward.1']
    #allocation4 [shape = 'u8[262144]{0}', space=vmem, size = 0x40000, scoped, tag = 'input window, operand 1, single buffered']
    #allocation5 [shape = 's32[1]{0}', space=sflag, size = 0x4, scoped, tag = 'scoped memory for posenet_forward.1']
    #allocation6 [shape = 'u8[65536]{0}', space=vmem, size = 0x10000, scoped, tag = 'input window, operand 3, single buffered']
    %10 = vsyncpa [#allocation3], 0
    %11 = vsyncpa [#allocation5], 0
    // Predicated region
    $region2: #{posenet_forward.1} parent=1 // pred_check
      _
    $region3: #{posenet_forward.1} parent=1 // pred_check_branch
      %13 = sbr.rel (0) target = $region5
    $region4: #{posenet_forward.1} parent=1 // pred_region
      %s15 = ssub.s32 1024, 1024
      %16 = vsyncadd [#allocation3], %s15
      %s17 = sshll.u32 [#allocation2], 4
      %s18 = int_to_ptr.vmem [resolvable:$true] %s17
      %23 = dma.hbm_to_vmem [thread:$0]  %s0, 1024, %s18, [#allocation3], 512, 512, 32
    $region5: #{posenet_forward.1} parent=1 // pred_fallthru
      _
    // Predicated region
    $region6: #{posenet_forward.1} parent=1 // pred_check
      _
    $region7: #{posenet_forward.1} parent=1 // pred_check_branch
      %25 = sbr.rel (0) target = $region9
    $region8: #{posenet_forward.1} parent=1 // pred_region
      %s27 = ssub.s32 8192, 8192
      %28 = vsyncadd [#allocation5], %s27
      %s29 = sshll.u32 [#allocation4], 4
      %s30 = int_to_ptr.vmem [resolvable:$true] %s29
      %35 = dma.hbm_to_vmem [thread:$0]  %s1, 8192, %s30, [#allocation5], 128, 128, 8
    $region9: #{posenet_forward.1} parent=1 // pred_fallthru
      _
    // Predicated region
    $region10: #{posenet_forward.1} parent=1 // pred_check
      _
    $region11: #{posenet_forward.1} parent=1 // pred_check_branch
      %37 = sbr.rel (0) target = $region13
    $region12: #{posenet_forward.1} parent=1 // pred_region
      _
    $region13: #{posenet_forward.1} parent=1 // pred_fallthru
      _
    // Predicated region
    $region14: #{posenet_forward.1} parent=1 // pred_check
      _
    $region15: #{posenet_forward.1} parent=1 // pred_check_branch
      %39 = sbr.rel (0) target = $region17
    $region16: #{posenet_forward.1} parent=1 // pred_region
      %s41 = ssub.s32 2048, 2048
      %42 = vsyncadd [#allocation5], %s41
      %s43 = sshll.u32 [#allocation6], 4
      %s44 = int_to_ptr.vmem [resolvable:$true] %s43
      %49 = dma.hbm_to_vmem [thread:$0]  %s3, 2048, %s44, [#allocation5], 64, 64, 4
    $region17: #{posenet_forward.1} parent=1 // pred_fallthru
      _
    // Predicated region
    $region18: #{posenet_forward.1} parent=1 // pred_check
      _
    $region19: #{posenet_forward.1} parent=1 // pred_check_branch
      %51 = sbr.rel (0) target = $region21
    $region20: #{posenet_forward.1} parent=1 // pred_region
      _
    $region21: #{posenet_forward.1} parent=1 // pred_fallthru
      _
    // Predicated region
    $region22: #{posenet_forward.1} parent=1 // pred_check
      _
    $region23: #{posenet_forward.1} parent=1 // pred_check_branch
      %53 = sbr.rel (0) target = $region25
    $region24: #{posenet_forward.1} parent=1 // pred_region
      %54 = dma.done [#allocation3], 1024
    $region25: #{posenet_forward.1} parent=1 // pred_fallthru
      _
    // Predicated region
    $region26: #{posenet_forward.1} parent=1 // pred_check
      _
    $region27: #{posenet_forward.1} parent=1 // pred_check_branch
      %56 = sbr.rel (0) target = $region29
    $region28: #{posenet_forward.1} parent=1 // pred_region
      %57 = dma.done [#allocation5], 8192
    $region29: #{posenet_forward.1} parent=1 // pred_fallthru
      _
    // Predicated region
    $region30: #{posenet_forward.1} parent=1 // pred_check
      _
    $region31: #{posenet_forward.1} parent=1 // pred_check_branch
      %59 = sbr.rel (0) target = $region33
    $region32: #{posenet_forward.1} parent=1 // pred_region
      %60 = dma.done [#allocation5], 2048
    $region33: #{posenet_forward.1} parent=1 // pred_fallthru
      _
    %v62 = vld [vmem:[#allocation2] sm:$0xff]
    %v63 = vld [vmem:[#allocation2 + $0x8] sm:$0xff]
    %v64 = vld [vmem:[#allocation2 + $0x10] sm:$0xff]
    %v65 = vld [vmem:[#allocation2 + $0x18] sm:$0xff]
    %v66 = vld [vmem:[#allocation2 + $0x20] sm:$0xff]
    %v67 = vld [vmem:[#allocation2 + $0x28] sm:$0xff]
    %v68 = vld [vmem:[#allocation2 + $0x30] sm:$0xff]
    %v69 = vld [vmem:[#allocation2 + $0x38] sm:$0xff]
    %v70 = vpack.c.bf16 %v66, %v62
    %v71 = vpack.c.bf16 %v67, %v63
    %v72 = vpack.c.bf16 %v68, %v64
    %v73 = vpack.c.bf16 %v69, %v65
    %v74 = vld [vmem:[#allocation4] sm:$0xff]
    %v75 = vld [vmem:[#allocation4 + $0x8] sm:$0xff]
    %v76 = vld [vmem:[#allocation4 + $0x10] sm:$0xff]
    %v77 = vld [vmem:[#allocation4 + $0x18] sm:$0xff]
    %v78 = vld [vmem:[#allocation4 + $0x20] sm:$0xff]
    %v79 = vld [vmem:[#allocation4 + $0x28] sm:$0xff]
    %v80 = vld [vmem:[#allocation4 + $0x30] sm:$0xff]
    %v81 = vld [vmem:[#allocation4 + $0x38] sm:$0xff]
    %v82 = vld [vmem:[#allocation4 + $0x40] sm:$0xff]
    %v83 = vld [vmem:[#allocation4 + $0x48] sm:$0xff]
    %v84 = vld [vmem:[#allocation4 + $0x50] sm:$0xff]
    %v85 = vld [vmem:[#allocation4 + $0x58] sm:$0xff]
    %v86 = vld [vmem:[#allocation4 + $0x60] sm:$0xff]
    %v87 = vld [vmem:[#allocation4 + $0x68] sm:$0xff]
    %v88 = vld [vmem:[#allocation4 + $0x70] sm:$0xff]
    %v89 = vld [vmem:[#allocation4 + $0x78] sm:$0xff]
    %v90 = vld [vmem:[#allocation4 + $0x80] sm:$0xff]
    %v91 = vld [vmem:[#allocation4 + $0x88] sm:$0xff]
    %v92 = vld [vmem:[#allocation4 + $0x90] sm:$0xff]
    %v93 = vld [vmem:[#allocation4 + $0x98] sm:$0xff]
    %v94 = vld [vmem:[#allocation4 + $0xa0] sm:$0xff]
    %v95 = vld [vmem:[#allocation4 + $0xa8] sm:$0xff]
    %v96 = vld [vmem:[#allocation4 + $0xb0] sm:$0xff]
    %v97 = vld [vmem:[#allocation4 + $0xb8] sm:$0xff]
    %v98 = vld [vmem:[#allocation4 + $0xc0] sm:$0xff]
    %v99 = vld [vmem:[#allocation4 + $0xc8] sm:$0xff]
    %v100 = vld [vmem:[#allocation4 + $0xd0] sm:$0xff]
    %v101 = vld [vmem:[#allocation4 + $0xd8] sm:$0xff]
    %v102 = vld [vmem:[#allocation4 + $0xe0] sm:$0xff]
    %v103 = vld [vmem:[#allocation4 + $0xe8] sm:$0xff]
    %v104 = vld [vmem:[#allocation4 + $0xf0] sm:$0xff]
    %v105 = vld [vmem:[#allocation4 + $0xf8] sm:$0xff]
    %v106 = vld [vmem:[#allocation4 + $0x100] sm:$0xff]
    %v107 = vld [vmem:[#allocation4 + $0x108] sm:$0xff]
    %v108 = vld [vmem:[#allocation4 + $0x110] sm:$0xff]
    %v109 = vld [vmem:[#allocation4 + $0x118] sm:$0xff]
    %v110 = vld [vmem:[#allocation4 + $0x120] sm:$0xff]
    %v111 = vld [vmem:[#allocation4 + $0x128] sm:$0xff]
    %v112 = vld [vmem:[#allocation4 + $0x130] sm:$0xff]
    %v113 = vld [vmem:[#allocation4 + $0x138] sm:$0xff]
    %v114 = vld [vmem:[#allocation4 + $0x140] sm:$0xff]
    %v115 = vld [vmem:[#allocation4 + $0x148] sm:$0xff]
    %v116 = vld [vmem:[#allocation4 + $0x150] sm:$0xff]
    %v117 = vld [vmem:[#allocation4 + $0x158] sm:$0xff]
    %v118 = vld [vmem:[#allocation4 + $0x160] sm:$0xff]
    %v119 = vld [vmem:[#allocation4 + $0x168] sm:$0xff]
    %v120 = vld [vmem:[#allocation4 + $0x170] sm:$0xff]
    %v121 = vld [vmem:[#allocation4 + $0x178] sm:$0xff]
    %v122 = vld [vmem:[#allocation4 + $0x180] sm:$0xff]
    %v123 = vld [vmem:[#allocation4 + $0x188] sm:$0xff]
    %v124 = vld [vmem:[#allocation4 + $0x190] sm:$0xff]
    %v125 = vld [vmem:[#allocation4 + $0x198] sm:$0xff]
    %v126 = vld [vmem:[#allocation4 + $0x1a0] sm:$0xff]
    %v127 = vld [vmem:[#allocation4 + $0x1a8] sm:$0xff]
    %v128 = vld [vmem:[#allocation4 + $0x1b0] sm:$0xff]
    %v129 = vld [vmem:[#allocation4 + $0x1b8] sm:$0xff]
    %v130 = vld [vmem:[#allocation4 + $0x1c0] sm:$0xff]
    %v131 = vld [vmem:[#allocation4 + $0x1c8] sm:$0xff]
    %v132 = vld [vmem:[#allocation4 + $0x1d0] sm:$0xff]
    %v133 = vld [vmem:[#allocation4 + $0x1d8] sm:$0xff]
    %v134 = vld [vmem:[#allocation4 + $0x1e0] sm:$0xff]
    %v135 = vld [vmem:[#allocation4 + $0x1e8] sm:$0xff]
    %v136 = vld [vmem:[#allocation4 + $0x1f0] sm:$0xff]
    %v137 = vld [vmem:[#allocation4 + $0x1f8] sm:$0xff]
    %v138 = vld [vmem:[%s2] sm:$0x3]
    %v140 = vlaneseq
    %v141 = vshrl.u32 %v140, 7
    %v142 = vsub.s32 0, %v141
    %v143 = vrot.slane %v138, %v142
    %v144 = vlaneseq
    %v145 = vshrl.u32 %v144, 7
    %v146 = vsub.s32 1, %v145
    %v147 = vrot.slane %v138, %v146
    %v214 = vunpack.c.l.b16 %v74
    %v215 = vunpack.c.h.b16 %v74
    %v216 = vunpack.c.l.b16 %v75
    %v217 = vunpack.c.h.b16 %v75
    %v218 = vunpack.c.l.b16 %v76
    %v219 = vunpack.c.h.b16 %v76
    %v220 = vunpack.c.l.b16 %v77
    %v221 = vunpack.c.h.b16 %v77
    %v222 = vunpack.c.l.b16 %v78
    %v223 = vunpack.c.h.b16 %v78
    %v224 = vunpack.c.l.b16 %v79
    %v225 = vunpack.c.h.b16 %v79
    %v226 = vunpack.c.l.b16 %v80
    %v227 = vunpack.c.h.b16 %v80
    %v228 = vunpack.c.l.b16 %v81
    %v229 = vunpack.c.h.b16 %v81
    %v230 = vunpack.c.l.b16 %v82
    %v231 = vunpack.c.h.b16 %v82
    %v232 = vunpack.c.l.b16 %v83
    %v233 = vunpack.c.h.b16 %v83
    %v234 = vunpack.c.l.b16 %v84
    %v235 = vunpack.c.h.b16 %v84
    %v236 = vunpack.c.l.b16 %v85
    %v237 = vunpack.c.h.b16 %v85
    %v238 = vunpack.c.l.b16 %v86
    %v239 = vunpack.c.h.b16 %v86
    %v240 = vunpack.c.l.b16 %v87
    %v241 = vunpack.c.h.b16 %v87
    %v242 = vunpack.c.l.b16 %v88
    %v243 = vunpack.c.h.b16 %v88
    %v244 = vunpack.c.l.b16 %v89
    %v245 = vunpack.c.h.b16 %v89
    %v246 = vunpack.c.l.b16 %v90
    %v247 = vunpack.c.h.b16 %v90
    %v248 = vunpack.c.l.b16 %v91
    %v249 = vunpack.c.h.b16 %v91
    %v250 = vunpack.c.l.b16 %v92
    %v251 = vunpack.c.h.b16 %v92
    %v252 = vunpack.c.l.b16 %v93
    %v253 = vunpack.c.h.b16 %v93
    %v254 = vunpack.c.l.b16 %v94
    %v255 = vunpack.c.h.b16 %v94
    %v256 = vunpack.c.l.b16 %v95
    %v257 = vunpack.c.h.b16 %v95
    %v258 = vunpack.c.l.b16 %v96
    %v259 = vunpack.c.h.b16 %v96
    %v260 = vunpack.c.l.b16 %v97
    %v261 = vunpack.c.h.b16 %v97
    %v262 = vunpack.c.l.b16 %v98
    %v263 = vunpack.c.h.b16 %v98
    %v264 = vunpack.c.l.b16 %v99
    %v265 = vunpack.c.h.b16 %v99
    %v266 = vunpack.c.l.b16 %v100
    %v267 = vunpack.c.h.b16 %v100
    %v268 = vunpack.c.l.b16 %v101
    %v269 = vunpack.c.h.b16 %v101
    %v270 = vunpack.c.l.b16 %v102
    %v271 = vunpack.c.h.b16 %v102
    %v272 = vunpack.c.l.b16 %v103
    %v273 = vunpack.c.h.b16 %v103
    %v274 = vunpack.c.l.b16 %v104
    %v275 = vunpack.c.h.b16 %v104
    %v276 = vunpack.c.l.b16 %v105
    %v277 = vunpack.c.h.b16 %v105
    %v278 = vunpack.c.l.b16 %v106
    %v279 = vunpack.c.h.b16 %v106
    %v280 = vunpack.c.l.b16 %v107
    %v281 = vunpack.c.h.b16 %v107
    %v282 = vunpack.c.l.b16 %v108
    %v283 = vunpack.c.h.b16 %v108
    %v284 = vunpack.c.l.b16 %v109
    %v285 = vunpack.c.h.b16 %v109
    %v286 = vunpack.c.l.b16 %v110
    %v287 = vunpack.c.h.b16 %v110
    %v288 = vunpack.c.l.b16 %v111
    %v289 = vunpack.c.h.b16 %v111
    %v290 = vunpack.c.l.b16 %v112
    %v291 = vunpack.c.h.b16 %v112
    %v292 = vunpack.c.l.b16 %v113
    %v293 = vunpack.c.h.b16 %v113
    %v294 = vunpack.c.l.b16 %v114
    %v295 = vunpack.c.h.b16 %v114
    %v296 = vunpack.c.l.b16 %v115
    %v297 = vunpack.c.h.b16 %v115
    %v298 = vunpack.c.l.b16 %v116
    %v299 = vunpack.c.h.b16 %v116
    %v300 = vunpack.c.l.b16 %v117
    %v301 = vunpack.c.h.b16 %v117
    %v302 = vunpack.c.l.b16 %v118
    %v303 = vunpack.c.h.b16 %v118
    %v304 = vunpack.c.l.b16 %v119
    %v305 = vunpack.c.h.b16 %v119
    %v306 = vunpack.c.l.b16 %v120
    %v307 = vunpack.c.h.b16 %v120
    %v308 = vunpack.c.l.b16 %v121
    %v309 = vunpack.c.h.b16 %v121
    %v310 = vunpack.c.l.b16 %v122
    %v311 = vunpack.c.h.b16 %v122
    %v312 = vunpack.c.l.b16 %v123
    %v313 = vunpack.c.h.b16 %v123
    %v314 = vunpack.c.l.b16 %v124
    %v315 = vunpack.c.h.b16 %v124
    %v316 = vunpack.c.l.b16 %v125
    %v317 = vunpack.c.h.b16 %v125
    %v318 = vunpack.c.l.b16 %v126
    %v319 = vunpack.c.h.b16 %v126
    %v320 = vunpack.c.l.b16 %v127
    %v321 = vunpack.c.h.b16 %v127
    %v322 = vunpack.c.l.b16 %v128
    %v323 = vunpack.c.h.b16 %v128
    %v324 = vunpack.c.l.b16 %v129
    %v325 = vunpack.c.h.b16 %v129
    %v326 = vunpack.c.l.b16 %v130
    %v327 = vunpack.c.h.b16 %v130
    %v328 = vunpack.c.l.b16 %v131
    %v329 = vunpack.c.h.b16 %v131
    %v330 = vunpack.c.l.b16 %v132
    %v331 = vunpack.c.h.b16 %v132
    %v332 = vunpack.c.l.b16 %v133
    %v333 = vunpack.c.h.b16 %v133
    %v334 = vunpack.c.l.b16 %v134
    %v335 = vunpack.c.h.b16 %v134
    %v336 = vunpack.c.l.b16 %v135
    %v337 = vunpack.c.h.b16 %v135
    %v338 = vunpack.c.l.b16 %v136
    %v339 = vunpack.c.h.b16 %v136
    %v340 = vunpack.c.l.b16 %v137
    %v341 = vunpack.c.h.b16 %v137
    %v342 = vpack.c.b16 %v216, %v214
    %v343 = vpack.c.b16 %v217, %v215
    %v344 = vpack.c.b16 %v220, %v218
    %v345 = vpack.c.b16 %v221, %v219
    %v346 = vpack.c.b16 %v224, %v222
    %v347 = vpack.c.b16 %v225, %v223
    %v348 = vpack.c.b16 %v228, %v226
    %v349 = vpack.c.b16 %v229, %v227
    %v350 = vpack.c.b16 %v232, %v230
    %v351 = vpack.c.b16 %v233, %v231
    %v352 = vpack.c.b16 %v236, %v234
    %v353 = vpack.c.b16 %v237, %v235
    %v354 = vpack.c.b16 %v240, %v238
    %v355 = vpack.c.b16 %v241, %v239
    %v356 = vpack.c.b16 %v244, %v242
    %v357 = vpack.c.b16 %v245, %v243
    %v358 = vpack.c.b16 %v248, %v246
    %v359 = vpack.c.b16 %v249, %v247
    %v360 = vpack.c.b16 %v252, %v250
    %v361 = vpack.c.b16 %v253, %v251
    %v362 = vpack.c.b16 %v256, %v254
    %v363 = vpack.c.b16 %v257, %v255
    %v364 = vpack.c.b16 %v260, %v258
    %v365 = vpack.c.b16 %v261, %v259
    %v366 = vpack.c.b16 %v264, %v262
    %v367 = vpack.c.b16 %v265, %v263
    %v368 = vpack.c.b16 %v268, %v266
    %v369 = vpack.c.b16 %v269, %v267
    %v370 = vpack.c.b16 %v272, %v270
    %v371 = vpack.c.b16 %v273, %v271
    %v372 = vpack.c.b16 %v276, %v274
    %v373 = vpack.c.b16 %v277, %v275
    %v374 = vpack.c.b16 %v280, %v278
    %v375 = vpack.c.b16 %v281, %v279
    %v376 = vpack.c.b16 %v284, %v282
    %v377 = vpack.c.b16 %v285, %v283
    %v378 = vpack.c.b16 %v288, %v286
    %v379 = vpack.c.b16 %v289, %v287
    %v380 = vpack.c.b16 %v292, %v290
    %v381 = vpack.c.b16 %v293, %v291
    %v382 = vpack.c.b16 %v296, %v294
    %v383 = vpack.c.b16 %v297, %v295
    %v384 = vpack.c.b16 %v300, %v298
    %v385 = vpack.c.b16 %v301, %v299
    %v386 = vpack.c.b16 %v304, %v302
    %v387 = vpack.c.b16 %v305, %v303
    %v388 = vpack.c.b16 %v308, %v306
    %v389 = vpack.c.b16 %v309, %v307
    %v390 = vpack.c.b16 %v312, %v310
    %v391 = vpack.c.b16 %v313, %v311
    %v392 = vpack.c.b16 %v316, %v314
    %v393 = vpack.c.b16 %v317, %v315
    %v394 = vpack.c.b16 %v320, %v318
    %v395 = vpack.c.b16 %v321, %v319
    %v396 = vpack.c.b16 %v324, %v322
    %v397 = vpack.c.b16 %v325, %v323
    %v398 = vpack.c.b16 %v328, %v326
    %v399 = vpack.c.b16 %v329, %v327
    %v400 = vpack.c.b16 %v332, %v330
    %v401 = vpack.c.b16 %v333, %v331
    %v402 = vpack.c.b16 %v336, %v334
    %v403 = vpack.c.b16 %v337, %v335
    %v404 = vpack.c.b16 %v340, %v338
    %v405 = vpack.c.b16 %v341, %v339
    %470 = vmatprep.subr.bf16.mxu0 %v343
    %471 = vmatpush1.bf16.msra.mxu0 %v342
    %472 = vmatprep.subr.bf16.mxu0 %v345
    %473 = vmatpush1.bf16.msra.mxu0 %v344
    %474 = vmatprep.subr.bf16.mxu0 %v347
    %475 = vmatpush1.bf16.msra.mxu0 %v346
    %476 = vmatprep.subr.bf16.mxu0 %v349
    %477 = vmatpush1.bf16.msra.mxu0 %v348
    %478 = vmatprep.subr.bf16.mxu0 %v351
    %479 = vmatpush1.bf16.msra.mxu0 %v350
    %480 = vmatprep.subr.bf16.mxu0 %v353
    %481 = vmatpush1.bf16.msra.mxu0 %v352
    %482 = vmatprep.subr.bf16.mxu0 %v355
    %483 = vmatpush1.bf16.msra.mxu0 %v354
    %484 = vmatprep.subr.bf16.mxu0 %v357
    %485 = vmatpush1.bf16.msra.mxu0 %v356
    %486 = vmatprep.subr.bf16.mxu0 %v359
    %487 = vmatpush1.bf16.msra.mxu0 %v358
    %488 = vmatprep.subr.bf16.mxu0 %v361
    %489 = vmatpush1.bf16.msra.mxu0 %v360
    %490 = vmatprep.subr.bf16.mxu0 %v363
    %491 = vmatpush1.bf16.msra.mxu0 %v362
    %492 = vmatprep.subr.bf16.mxu0 %v365
    %493 = vmatpush1.bf16.msra.mxu0 %v364
    %494 = vmatprep.subr.bf16.mxu0 %v367
    %495 = vmatpush1.bf16.msra.mxu0 %v366
    %496 = vmatprep.subr.bf16.mxu0 %v369
    %497 = vmatpush1.bf16.msra.mxu0 %v368
    %498 = vmatprep.subr.bf16.mxu0 %v371
    %499 = vmatpush1.bf16.msra.mxu0 %v370
    %500 = vmatprep.subr.bf16.mxu0 %v373
    %501 = vmatpush1.bf16.msra.mxu0 %v372
    %502 = vmatprep.mubr.bf16.mxu0 %v71
    %503 = vmatmul.mubr.bf16.gmra.mrb[0].mxu0 %v70
    %v504 = vpop.f32.mrb[0].mxu0
    %v505 = vadd.f32 %v143, %v504
    %v506 = vpop.f32.mrb[0].mxu0
    %v507 = vadd.f32 %v147, %v506
    %v508 = vpop.f32.mrb[0].mxu0
    %v509 = vadd.f32 %v143, %v508
    %v510 = vpop.f32.mrb[0].mxu0
    %v511 = vadd.f32 %v147, %v510
    %512 = vdwg.mxu0
    %513 = vmatprep.subr.bf16.mxu0 %v375
    %514 = vmatpush1.bf16.msra.mxu0 %v374
    %515 = vmatprep.subr.bf16.mxu0 %v377
    %516 = vmatpush1.bf16.msra.mxu0 %v376
    %517 = vmatprep.subr.bf16.mxu0 %v379
    %518 = vmatpush1.bf16.msra.mxu0 %v378
    %519 = vmatprep.subr.bf16.mxu0 %v381
    %520 = vmatpush1.bf16.msra.mxu0 %v380
    %521 = vmatprep.subr.bf16.mxu0 %v383
    %522 = vmatpush1.bf16.msra.mxu0 %v382
    %523 = vmatprep.subr.bf16.mxu0 %v385
    %524 = vmatpush1.bf16.msra.mxu0 %v384
    %525 = vmatprep.subr.bf16.mxu0 %v387
    %526 = vmatpush1.bf16.msra.mxu0 %v386
    %527 = vmatprep.subr.bf16.mxu0 %v389
    %528 = vmatpush1.bf16.msra.mxu0 %v388
    %529 = vmatprep.subr.bf16.mxu0 %v391
    %530 = vmatpush1.bf16.msra.mxu0 %v390
    %531 = vmatprep.subr.bf16.mxu0 %v393
    %532 = vmatpush1.bf16.msra.mxu0 %v392
    %533 = vmatprep.subr.bf16.mxu0 %v395
    %534 = vmatpush1.bf16.msra.mxu0 %v394
    %535 = vmatprep.subr.bf16.mxu0 %v397
    %536 = vmatpush1.bf16.msra.mxu0 %v396
    %537 = vmatprep.subr.bf16.mxu0 %v399
    %538 = vmatpush1.bf16.msra.mxu0 %v398
    %539 = vmatprep.subr.bf16.mxu0 %v401
    %540 = vmatpush1.bf16.msra.mxu0 %v400
    %541 = vmatprep.subr.bf16.mxu0 %v403
    %542 = vmatpush1.bf16.msra.mxu0 %v402
    %543 = vmatprep.subr.bf16.mxu0 %v405
    %544 = vmatpush1.bf16.msra.mxu0 %v404
    %545 = vmatprep.mubr.bf16.mxu0 %v73
    %546 = vmatmul.mubr.bf16.gmra.mrb[0].mxu0 %v72
    %v547 = vpop.f32.mrb[0].mxu0
    %v548 = vadd.f32 %v505, %v547
    %v549 = vpop.f32.mrb[0].mxu0
    %v550 = vadd.f32 %v507, %v549
    %v551 = vpop.f32.mrb[0].mxu0
    %v552 = vadd.f32 %v509, %v551
    %v553 = vpop.f32.mrb[0].mxu0
    %v554 = vadd.f32 %v511, %v553
    %555 = vdwg.mxu0
    %v556 = vmax.f32 %v548, 0.0
    %v557 = vmax.f32 %v550, 0.0
    %v558 = vmax.f32 %v552, 0.0
    %v559 = vmax.f32 %v554, 0.0
    %v560 = vpack.c.bf16 %v558, %v556
    %v561 = vpack.c.bf16 %v559, %v557
    %v562 = vld [vmem:[#allocation6] sm:$0xf]
    %v563 = vld [vmem:[#allocation6 + $0x4] sm:$0xf]
    %v564 = vld [vmem:[#allocation6 + $0x8] sm:$0xf]
    %v565 = vld [vmem:[#allocation6 + $0xc] sm:$0xf]
    %v566 = vld [vmem:[#allocation6 + $0x10] sm:$0xf]
    %v567 = vld [vmem:[#allocation6 + $0x14] sm:$0xf]
    %v568 = vld [vmem:[#allocation6 + $0x18] sm:$0xf]
    %v569 = vld [vmem:[#allocation6 + $0x1c] sm:$0xf]
    %v570 = vld [vmem:[#allocation6 + $0x20] sm:$0xf]
    %v571 = vld [vmem:[#allocation6 + $0x24] sm:$0xf]
    %v572 = vld [vmem:[#allocation6 + $0x28] sm:$0xf]
    %v573 = vld [vmem:[#allocation6 + $0x2c] sm:$0xf]
    %v574 = vld [vmem:[#allocation6 + $0x30] sm:$0xf]
    %v575 = vld [vmem:[#allocation6 + $0x34] sm:$0xf]
    %v576 = vld [vmem:[#allocation6 + $0x38] sm:$0xf]
    %v577 = vld [vmem:[#allocation6 + $0x3c] sm:$0xf]
    %v578 = vld [vmem:[#allocation6 + $0x40] sm:$0xf]
    %v579 = vld [vmem:[#allocation6 + $0x44] sm:$0xf]
    %v580 = vld [vmem:[#allocation6 + $0x48] sm:$0xf]
    %v581 = vld [vmem:[#allocation6 + $0x4c] sm:$0xf]
    %v582 = vld [vmem:[#allocation6 + $0x50] sm:$0xf]
    %v583 = vld [vmem:[#allocation6 + $0x54] sm:$0xf]
    %v584 = vld [vmem:[#allocation6 + $0x58] sm:$0xf]
    %v585 = vld [vmem:[#allocation6 + $0x5c] sm:$0xf]
    %v586 = vld [vmem:[#allocation6 + $0x60] sm:$0xf]
    %v587 = vld [vmem:[#allocation6 + $0x64] sm:$0xf]
    %v588 = vld [vmem:[#allocation6 + $0x68] sm:$0xf]
    %v589 = vld [vmem:[#allocation6 + $0x6c] sm:$0xf]
    %v590 = vld [vmem:[#allocation6 + $0x70] sm:$0xf]
    %v591 = vld [vmem:[#allocation6 + $0x74] sm:$0xf]
    %v592 = vld [vmem:[#allocation6 + $0x78] sm:$0xf]
    %v593 = vld [vmem:[#allocation6 + $0x7c] sm:$0xf]
    %v594 = vld [vmem:[%s4] sm:$0x1]
    %v596 = vlaneseq
    %v597 = vshrl.u32 %v596, 7
    %v598 = vsub.s32 0, %v597
    %v599 = vrot.slane %v594, %v598
    %v633 = vunpack.c.l.b16 %v562
    %v634 = vunpack.c.l.b16 %v563
    %v635 = vunpack.c.l.b16 %v564
    %v636 = vunpack.c.l.b16 %v565
    %v637 = vunpack.c.l.b16 %v566
    %v638 = vunpack.c.l.b16 %v567
    %v639 = vunpack.c.l.b16 %v568
    %v640 = vunpack.c.l.b16 %v569
    %v641 = vunpack.c.l.b16 %v570
    %v642 = vunpack.c.l.b16 %v571
    %v643 = vunpack.c.l.b16 %v572
    %v644 = vunpack.c.l.b16 %v573
    %v645 = vunpack.c.l.b16 %v574
    %v646 = vunpack.c.l.b16 %v575
    %v647 = vunpack.c.l.b16 %v576
    %v648 = vunpack.c.l.b16 %v577
    %v649 = vunpack.c.l.b16 %v578
    %v650 = vunpack.c.l.b16 %v579
    %v651 = vunpack.c.l.b16 %v580
    %v652 = vunpack.c.l.b16 %v581
    %v653 = vunpack.c.l.b16 %v582
    %v654 = vunpack.c.l.b16 %v583
    %v655 = vunpack.c.l.b16 %v584
    %v656 = vunpack.c.l.b16 %v585
    %v657 = vunpack.c.l.b16 %v586
    %v658 = vunpack.c.l.b16 %v587
    %v659 = vunpack.c.l.b16 %v588
    %v660 = vunpack.c.l.b16 %v589
    %v661 = vunpack.c.l.b16 %v590
    %v662 = vunpack.c.l.b16 %v591
    %v663 = vunpack.c.l.b16 %v592
    %v664 = vunpack.c.l.b16 %v593
    %v665 = vpack.c.b16 %v634, %v633
    %v666 = vpack.c.b16 %v636, %v635
    %v667 = vpack.c.b16 %v638, %v637
    %v668 = vpack.c.b16 %v640, %v639
    %v669 = vpack.c.b16 %v642, %v641
    %v670 = vpack.c.b16 %v644, %v643
    %v671 = vpack.c.b16 %v646, %v645
    %v672 = vpack.c.b16 %v648, %v647
    %v673 = vpack.c.b16 %v650, %v649
    %v674 = vpack.c.b16 %v652, %v651
    %v675 = vpack.c.b16 %v654, %v653
    %v676 = vpack.c.b16 %v656, %v655
    %v677 = vpack.c.b16 %v658, %v657
    %v678 = vpack.c.b16 %v660, %v659
    %v679 = vpack.c.b16 %v662, %v661
    %v680 = vpack.c.b16 %v664, %v663
    %697 = vmatprep.subr.bf16.mxu0 0
    %698 = vmatpush1.bf16.msra.mxu0 %v665
    %699 = vmatprep.subr.bf16.mxu0 0
    %700 = vmatpush1.bf16.msra.mxu0 %v666
    %701 = vmatprep.subr.bf16.mxu0 0
    %702 = vmatpush1.bf16.msra.mxu0 %v667
    %703 = vmatprep.subr.bf16.mxu0 0
    %704 = vmatpush1.bf16.msra.mxu0 %v668
    %705 = vmatprep.subr.bf16.mxu0 0
    %706 = vmatpush1.bf16.msra.mxu0 %v669
    %707 = vmatprep.subr.bf16.mxu0 0
    %708 = vmatpush1.bf16.msra.mxu0 %v670
    %709 = vmatprep.subr.bf16.mxu0 0
    %710 = vmatpush1.bf16.msra.mxu0 %v671
    %711 = vmatprep.subr.bf16.mxu0 0
    %712 = vmatpush1.bf16.msra.mxu0 %v672
    %713 = vmatprep.subr.bf16.mxu0 0
    %714 = vmatpush1.bf16.msra.mxu0 %v673
    %715 = vmatprep.subr.bf16.mxu0 0
    %716 = vmatpush1.bf16.msra.mxu0 %v674
    %717 = vmatprep.subr.bf16.mxu0 0
    %718 = vmatpush1.bf16.msra.mxu0 %v675
    %719 = vmatprep.subr.bf16.mxu0 0
    %720 = vmatpush1.bf16.msra.mxu0 %v676
    %721 = vmatprep.subr.bf16.mxu0 0
    %722 = vmatpush1.bf16.msra.mxu0 %v677
    %723 = vmatprep.subr.bf16.mxu0 0
    %724 = vmatpush1.bf16.msra.mxu0 %v678
    %725 = vmatprep.subr.bf16.mxu0 0
    %726 = vmatpush1.bf16.msra.mxu0 %v679
    %727 = vmatprep.subr.bf16.mxu0 0
    %728 = vmatpush1.bf16.msra.mxu0 %v680
    %729 = vmatprep.mubr.bf16.mxu0 %v561
    %730 = vmatmul.mubr.bf16.gmra.mrb[0].mxu0 %v560
    %v731 = vpop.f32.mrb[0].mxu0
    %v732 = vadd.f32 %v599, %v731
    %v733 = vpop.f32.mrb[0].mxu0
    %v734 = vpop.f32.mrb[0].mxu0
    %v735 = vadd.f32 %v599, %v734
    %v736 = vpop.f32.mrb[0].mxu0
    %737 = vdwg.mxu0
    %v738 = vlaneseq
    %v739 = vand.u32 %v738, 127
    %vm740 = vcmp.ge.s32.totalorder %v739, 3
    %vm741 = vcmp.lt.s32.totalorder %v739, 7
    %vm742 = vmand %vm740, %vm741
    %v743 = vmul.f32 %v732, %v732
    %v744 = vmul.f32 %v735, %v735
    %v745 = vsel %vm742, %v743, 0.0
    %v746 = vsel %vm742, %v744, 0.0
    %vm747 = vcmask 64512
    %v748 = vsel %vm747, %v745, 0.0
    %749 = vadd.xlane.f32.xlu0 %v748
    %v750 = vpop.xlane.xlu0 %749
    %v751 = vsel %vm747, %v746, 0.0
    %752 = vadd.xlane.f32.xlu0 %v751
    %v753 = vpop.xlane.xlu0 %752
    %v754 = vmax.f32 %v750, 1e-24
    %v755 = vmax.f32 %v753, 1e-24
    %v756 = vrsqrt.pop %v754
    %v757 = vrsqrt.pop %v755
    %v758 = vmul.f32 %v732, %v756
    %v759 = vmul.f32 %v735, %v757
    %v760 = vsel %vm742, %v758, %v732
    %v761 = vsel %vm742, %v759, %v735
    %762 = vst.msk [vmem:[%s5] sm:$0xff] %vm747, %v760
    %763 = vst.msk [vmem:[%s5 + $0x8] sm:$0xff] %vm747, %v761
    // Predicated region
    $region34: #{posenet_forward.1} parent=1 // pred_check
      _
    $region35: #{posenet_forward.1} parent=1 // pred_check_branch
      %765 = sbr.rel (0) target = $region37
    $region36: #{posenet_forward.1} parent=1 // pred_region
      _
    $region37: #{posenet_forward.1} parent=1 // pred_fallthru
      _
    // Predicated region
    $region38: #{posenet_forward.1} parent=1 // pred_check
      _
    $region39: #{posenet_forward.1} parent=1 // pred_check_branch
      %767 = sbr.rel (0) target = $region41
    $region40: #{posenet_forward.1} parent=1 // pred_region
      _
    $region41: #{posenet_forward.1} parent=1 // pred_fallthru
      _
    %768 = vsyncpa [#allocation3], 1
    %769 = vsyncpa [#allocation5], 1

</llo_original>
